<compile_context>
chip_gen: v7x
topology: tpu7x:2x2x1
jax: 0.10.0
libtpu: 0.0.40
codegen_flags: <defaults>
</compile_context>

<pallas_src>
import functools

import jax
import jax.numpy as jnp
from jax import lax
from jax.experimental import pallas as pl
from jax.experimental.pallas import tpu as pltpu


def rnn_kernel(emb_ref, vT_ref, bv_ref, wT_ref, bw_ref, out_ref):
    """Full recurrence for one batch tile in a single kernel invocation.

    emb_ref : (T, BB, d)   time-major embedded inputs (VMEM resident)
    vT_ref  : (d, d)       V weight, transposed (in, out)
    bv_ref  : (1, d)       V bias
    wT_ref  : (d, NPAD)    W weight, transposed & zero-padded to lane-dense NPAD
    bw_ref  : (1, NPAD)    W bias, padded with -1e30 on fake lanes
    out_ref : (BB, NPAD)   softmax probabilities (fake lanes are exactly 0)
    """
    T, BB, dd = emb_ref.shape

    vT = vT_ref[...]
    # Hoist the bias broadcast out of the timestep loop (done once).
    bv = jnp.broadcast_to(bv_ref[...], (BB, dd))

    def step(t, h):
        pre = (
            emb_ref[t]
            + jnp.dot(h, vT, preferred_element_type=jnp.float32)
            + bv
        )
        return jnp.tanh(pre)

    h0 = jnp.zeros((BB, dd), jnp.float32)
    h = lax.fori_loop(0, T, step, h0, unroll=True)

    # Classifier + softmax. Padded lanes carry bias -1e30 -> exp underflows to
    # exactly 0, so the softmax over the full 128 lanes equals softmax over the
    # real 2 logits.
    logits = (
        jnp.dot(h, wT_ref[...], preferred_element_type=jnp.float32)
        + bw_ref[...]
    )
    m = jnp.max(logits, axis=1, keepdims=True)
    e = jnp.exp(logits - m)
    out_ref[...] = e / jnp.sum(e, axis=1, keepdims=True)


def rnn_forward(x_ids, emb_table, v_w, v_b, w_w, w_b, block_b=None):
    """x_ids: (B, T) int32 token ids.  Returns (B, 2) softmax probs."""
    B, T = x_ids.shape
    d = emb_table.shape[1]
    n_out = w_w.shape[0]                       # 2
    n_pad = max(128, ((n_out + 127) // 128) * 128)  # lane-dense output width

    # Batch tiling: one tile at small B; multiple independent ("parallel")
    # tiles for large batches (v7x dual-TC sharding).
    if block_b is None:
        block_b = 256 if (B > 256 and B % 256 == 0) else B
    assert B % block_b == 0
    n_btiles = B // block_b

    # Glue: embedding gather, time-major directly (no extra transpose).
    emb = jnp.take(emb_table, x_ids.T, axis=0).astype(jnp.float32)  # (T, B, d)

    vT = v_w.T.astype(jnp.float32)                      # (d, d)
    bv = v_b.reshape(1, d).astype(jnp.float32)          # (1, d)

    # Lane-dense padding of the classifier head: zero weights, -1e30 bias on
    # the fake lanes -> padded logits vanish under softmax.
    wT = jnp.zeros((d, n_pad), jnp.float32).at[:, :n_out].set(
        w_w.T.astype(jnp.float32)
    )
    bw = jnp.full((1, n_pad), -1e30, jnp.float32).at[:, :n_out].set(
        w_b.reshape(1, n_out).astype(jnp.float32)
    )

    out_full = pl.pallas_call(
        rnn_kernel,
        out_shape=jax.ShapeDtypeStruct((B, n_pad), jnp.float32),
        grid_spec=pltpu.PrefetchScalarGridSpec(
            num_scalar_prefetch=0,
            grid=(n_btiles,),
            in_specs=[
                pl.BlockSpec((T, block_b, d), lambda i: (0, i, 0)),  # emb slab
                pl.BlockSpec((d, d), lambda i: (0, 0)),              # V^T
                pl.BlockSpec((1, d), lambda i: (0, 0)),              # b_V
                pl.BlockSpec((d, n_pad), lambda i: (0, 0)),          # W^T (padded)
                pl.BlockSpec((1, n_pad), lambda i: (0, 0)),          # b_W (padded)
            ],
            out_specs=pl.BlockSpec((block_b, n_pad), lambda i: (i, 0)),
        ),
        compiler_params=pltpu.CompilerParams(
            dimension_semantics=("parallel",),  # independent batch tiles
        ),
    )(emb, vT, bv, wT, bw)

    return out_full[:, :n_out]


def reference_forward(x_ids, emb_table, v_w, v_b, w_w, w_b):
    """Pure-JAX reference matching the PyTorch forward."""
    B, T = x_ids.shape
    d = emb_table.shape[1]
    h = jnp.zeros((B, d), jnp.float32)
    for t in range(T):
        emb_t = emb_table[x_ids[:, t]]
        h = jnp.tanh(emb_t + h @ v_w.T + v_b)
    logits = h @ w_w.T + w_b
    return jax.nn.softmax(logits, axis=1)


if __name__ == "__main__":
    d = 128          # hidden dim (matches module-level d = 128)
    vocab_size = 12  # ['PAD', 'UNK'] + 10 tokens (synthetic)
    B, T = 8, 8      # small batch / sequence length

    key = jax.random.PRNGKey(0)
    k_emb, k_vw, k_vb, k_ww, k_wb, k_x = jax.random.split(key, 6)

    emb_table = jax.random.normal(k_emb, (vocab_size, d), jnp.float32) * 0.1
    v_w = jax.random.normal(k_vw, (d, d), jnp.float32) * 0.05   # nn.Linear(d, d).weight
    v_b = jax.random.normal(k_vb, (d,), jnp.float32) * 0.05
    w_w = jax.random.normal(k_ww, (2, d), jnp.float32) * 0.05   # nn.Linear(d, 2).weight
    w_b = jax.random.normal(k_wb, (2,), jnp.float32) * 0.05

    x_ids = jax.random.randint(k_x, (B, T), 0, vocab_size, jnp.int32)

    out = rnn_forward(x_ids, emb_table, v_w, v_b, w_w, w_b)
    out = jax.block_until_ready(out)

    ref = reference_forward(x_ids, emb_table, v_w, v_b, w_w, w_b)
    assert out.shape == (B, 2)
    assert jnp.allclose(out, ref, atol=1e-5, rtol=1e-5), (out, ref)
    assert jnp.allclose(jnp.sum(out, axis=1), 1.0, atol=1e-5)

    print("KERNEL_OK")
</pallas_src>

<mosaic_0001>
module attributes {stable_mosaic.version = 11 : i64} {
  func.func @rnn_kernel(%arg0: i32, %arg1: memref<8x8x128xf32, #tpu.memory_space<vmem>>, %arg2: memref<128x128xf32, #tpu.memory_space<vmem>>, %arg3: memref<1x128xf32, #tpu.memory_space<vmem>>, %arg4: memref<128x128xf32, #tpu.memory_space<vmem>>, %arg5: memref<1x128xf32, #tpu.memory_space<vmem>>, %arg6: memref<8x128xf32, #tpu.memory_space<vmem>>) attributes {dimension_semantics = [#tpu.dimension_semantics<parallel>], iteration_bounds = array<i64: 1>, scalar_prefetch = 0 : i64, scratch_operands = 0 : i64, tpu.core_type = #tpu.core_type<tc>, window_params = [{transform_indices = @transform_0, window_bounds = array<i64: 8, 8, 128>}, {pipeline_mode = #tpu.pipeline_mode<synchronous>, transform_indices = @transform_1, window_bounds = array<i64: 128, 128>}, {pipeline_mode = #tpu.pipeline_mode<synchronous>, transform_indices = @transform_2, window_bounds = array<i64: 1, 128>}, {pipeline_mode = #tpu.pipeline_mode<synchronous>, transform_indices = @transform_3, window_bounds = array<i64: 128, 128>}, {pipeline_mode = #tpu.pipeline_mode<synchronous>, transform_indices = @transform_4, window_bounds = array<i64: 1, 128>}, {transform_indices = @transform_5, window_bounds = array<i64: 8, 128>}]} {
    %c0 = arith.constant 0 : index
    %c0_0 = arith.constant 0 : index
    %0 = vector.load %arg2[%c0, %c0_0] : memref<128x128xf32, #tpu.memory_space<vmem>>, vector<128x128xf32>
    %c0_1 = arith.constant 0 : index
    %c0_2 = arith.constant 0 : index
    %1 = vector.load %arg3[%c0_1, %c0_2] : memref<1x128xf32, #tpu.memory_space<vmem>>, vector<1x128xf32>
    %2 = vector.shape_cast %1 : vector<1x128xf32> to vector<1x128xf32>
    %3 = vector.broadcast %2 : vector<1x128xf32> to vector<8x128xf32>
    %cst = arith.constant 0.000000e+00 : f32
    %4 = vector.broadcast %cst : f32 to vector<8x128xf32>
    %c0_i32 = arith.constant 0 : i32
    %5 = arith.index_cast %c0_i32 : i32 to index
    %c0_3 = arith.constant 0 : index
    %c0_4 = arith.constant 0 : index
    %6 = vector.load %arg1[%5, %c0_3, %c0_4] : memref<8x8x128xf32, #tpu.memory_space<vmem>>, vector<1x8x128xf32>
    %7 = vector.shape_cast %6 : vector<1x8x128xf32> to vector<8x128xf32>
    %cst_5 = arith.constant dense<0.000000e+00> : vector<8x128xf32>
    %8 = tpu.matmul %4, %0, %cst_5 {dimension_numbers = #tpu.dot_dimension_numbers<[1], [0], [0], [1], [0, 0, 1, 1], [], []>} : vector<8x128xf32>, vector<128x128xf32>, vector<8x128xf32> -> vector<8x128xf32>
    %9 = arith.addf %7, %8 : vector<8x128xf32>
    %10 = arith.addf %9, %3 : vector<8x128xf32>
    %11 = math.tanh %10 : vector<8x128xf32>
    %c1_i32 = arith.constant 1 : i32
    %12 = arith.index_cast %c1_i32 : i32 to index
    %c0_6 = arith.constant 0 : index
    %c0_7 = arith.constant 0 : index
    %13 = vector.load %arg1[%12, %c0_6, %c0_7] : memref<8x8x128xf32, #tpu.memory_space<vmem>>, vector<1x8x128xf32>
    %14 = vector.shape_cast %13 : vector<1x8x128xf32> to vector<8x128xf32>
    %cst_8 = arith.constant dense<0.000000e+00> : vector<8x128xf32>
    %15 = tpu.matmul %11, %0, %cst_8 {dimension_numbers = #tpu.dot_dimension_numbers<[1], [0], [0], [1], [0, 0, 1, 1], [], []>} : vector<8x128xf32>, vector<128x128xf32>, vector<8x128xf32> -> vector<8x128xf32>
    %16 = arith.addf %14, %15 : vector<8x128xf32>
    %17 = arith.addf %16, %3 : vector<8x128xf32>
    %18 = math.tanh %17 : vector<8x128xf32>
    %c2_i32 = arith.constant 2 : i32
    %19 = arith.index_cast %c2_i32 : i32 to index
    %c0_9 = arith.constant 0 : index
    %c0_10 = arith.constant 0 : index
    %20 = vector.load %arg1[%19, %c0_9, %c0_10] : memref<8x8x128xf32, #tpu.memory_space<vmem>>, vector<1x8x128xf32>
    %21 = vector.shape_cast %20 : vector<1x8x128xf32> to vector<8x128xf32>
    %cst_11 = arith.constant dense<0.000000e+00> : vector<8x128xf32>
    %22 = tpu.matmul %18, %0, %cst_11 {dimension_numbers = #tpu.dot_dimension_numbers<[1], [0], [0], [1], [0, 0, 1, 1], [], []>} : vector<8x128xf32>, vector<128x128xf32>, vector<8x128xf32> -> vector<8x128xf32>
    %23 = arith.addf %21, %22 : vector<8x128xf32>
    %24 = arith.addf %23, %3 : vector<8x128xf32>
    %25 = math.tanh %24 : vector<8x128xf32>
    %c3_i32 = arith.constant 3 : i32
    %26 = arith.index_cast %c3_i32 : i32 to index
    %c0_12 = arith.constant 0 : index
    %c0_13 = arith.constant 0 : index
    %27 = vector.load %arg1[%26, %c0_12, %c0_13] : memref<8x8x128xf32, #tpu.memory_space<vmem>>, vector<1x8x128xf32>
    %28 = vector.shape_cast %27 : vector<1x8x128xf32> to vector<8x128xf32>
    %cst_14 = arith.constant dense<0.000000e+00> : vector<8x128xf32>
    %29 = tpu.matmul %25, %0, %cst_14 {dimension_numbers = #tpu.dot_dimension_numbers<[1], [0], [0], [1], [0, 0, 1, 1], [], []>} : vector<8x128xf32>, vector<128x128xf32>, vector<8x128xf32> -> vector<8x128xf32>
    %30 = arith.addf %28, %29 : vector<8x128xf32>
    %31 = arith.addf %30, %3 : vector<8x128xf32>
    %32 = math.tanh %31 : vector<8x128xf32>
    %c4_i32 = arith.constant 4 : i32
    %33 = arith.index_cast %c4_i32 : i32 to index
    %c0_15 = arith.constant 0 : index
    %c0_16 = arith.constant 0 : index
    %34 = vector.load %arg1[%33, %c0_15, %c0_16] : memref<8x8x128xf32, #tpu.memory_space<vmem>>, vector<1x8x128xf32>
    %35 = vector.shape_cast %34 : vector<1x8x128xf32> to vector<8x128xf32>
    %cst_17 = arith.constant dense<0.000000e+00> : vector<8x128xf32>
    %36 = tpu.matmul %32, %0, %cst_17 {dimension_numbers = #tpu.dot_dimension_numbers<[1], [0], [0], [1], [0, 0, 1, 1], [], []>} : vector<8x128xf32>, vector<128x128xf32>, vector<8x128xf32> -> vector<8x128xf32>
    %37 = arith.addf %35, %36 : vector<8x128xf32>
    %38 = arith.addf %37, %3 : vector<8x128xf32>
    %39 = math.tanh %38 : vector<8x128xf32>
    %c5_i32 = arith.constant 5 : i32
    %40 = arith.index_cast %c5_i32 : i32 to index
    %c0_18 = arith.constant 0 : index
    %c0_19 = arith.constant 0 : index
    %41 = vector.load %arg1[%40, %c0_18, %c0_19] : memref<8x8x128xf32, #tpu.memory_space<vmem>>, vector<1x8x128xf32>
    %42 = vector.shape_cast %41 : vector<1x8x128xf32> to vector<8x128xf32>
    %cst_20 = arith.constant dense<0.000000e+00> : vector<8x128xf32>
    %43 = tpu.matmul %39, %0, %cst_20 {dimension_numbers = #tpu.dot_dimension_numbers<[1], [0], [0], [1], [0, 0, 1, 1], [], []>} : vector<8x128xf32>, vector<128x128xf32>, vector<8x128xf32> -> vector<8x128xf32>
    %44 = arith.addf %42, %43 : vector<8x128xf32>
    %45 = arith.addf %44, %3 : vector<8x128xf32>
    %46 = math.tanh %45 : vector<8x128xf32>
    %c6_i32 = arith.constant 6 : i32
    %47 = arith.index_cast %c6_i32 : i32 to index
    %c0_21 = arith.constant 0 : index
    %c0_22 = arith.constant 0 : index
    %48 = vector.load %arg1[%47, %c0_21, %c0_22] : memref<8x8x128xf32, #tpu.memory_space<vmem>>, vector<1x8x128xf32>
    %49 = vector.shape_cast %48 : vector<1x8x128xf32> to vector<8x128xf32>
    %cst_23 = arith.constant dense<0.000000e+00> : vector<8x128xf32>
    %50 = tpu.matmul %46, %0, %cst_23 {dimension_numbers = #tpu.dot_dimension_numbers<[1], [0], [0], [1], [0, 0, 1, 1], [], []>} : vector<8x128xf32>, vector<128x128xf32>, vector<8x128xf32> -> vector<8x128xf32>
    %51 = arith.addf %49, %50 : vector<8x128xf32>
    %52 = arith.addf %51, %3 : vector<8x128xf32>
    %53 = math.tanh %52 : vector<8x128xf32>
    %c7_i32 = arith.constant 7 : i32
    %54 = arith.index_cast %c7_i32 : i32 to index
    %c0_24 = arith.constant 0 : index
    %c0_25 = arith.constant 0 : index
    %55 = vector.load %arg1[%54, %c0_24, %c0_25] : memref<8x8x128xf32, #tpu.memory_space<vmem>>, vector<1x8x128xf32>
    %56 = vector.shape_cast %55 : vector<1x8x128xf32> to vector<8x128xf32>
    %cst_26 = arith.constant dense<0.000000e+00> : vector<8x128xf32>
    %57 = tpu.matmul %53, %0, %cst_26 {dimension_numbers = #tpu.dot_dimension_numbers<[1], [0], [0], [1], [0, 0, 1, 1], [], []>} : vector<8x128xf32>, vector<128x128xf32>, vector<8x128xf32> -> vector<8x128xf32>
    %58 = arith.addf %56, %57 : vector<8x128xf32>
    %59 = arith.addf %58, %3 : vector<8x128xf32>
    %60 = math.tanh %59 : vector<8x128xf32>
    %c8_i32 = arith.constant 8 : i32
    %c0_27 = arith.constant 0 : index
    %c0_28 = arith.constant 0 : index
    %61 = vector.load %arg4[%c0_27, %c0_28] : memref<128x128xf32, #tpu.memory_space<vmem>>, vector<128x128xf32>
    %cst_29 = arith.constant dense<0.000000e+00> : vector<8x128xf32>
    %62 = tpu.matmul %60, %61, %cst_29 {dimension_numbers = #tpu.dot_dimension_numbers<[1], [0], [0], [1], [0, 0, 1, 1], [], []>} : vector<8x128xf32>, vector<128x128xf32>, vector<8x128xf32> -> vector<8x128xf32>
    %c0_30 = arith.constant 0 : index
    %c0_31 = arith.constant 0 : index
    %63 = vector.load %arg5[%c0_30, %c0_31] : memref<1x128xf32, #tpu.memory_space<vmem>>, vector<1x128xf32>
    %64 = vector.broadcast %63 : vector<1x128xf32> to vector<8x128xf32>
    %65 = arith.addf %62, %64 : vector<8x128xf32>
    %cst_32 = arith.constant dense<0xFF800000> : vector<8xf32>
    %66 = vector.multi_reduction <maximumf>, %65, %cst_32 [1] : vector<8x128xf32> to vector<8xf32>
    %67 = vector.shape_cast %66 : vector<8xf32> to vector<8x1xf32>
    %68 = vector.broadcast %67 : vector<8x1xf32> to vector<8x128xf32>
    %69 = arith.subf %65, %68 : vector<8x128xf32>
    %70 = math.exp %69 : vector<8x128xf32>
    %cst_33 = arith.constant dense<0.000000e+00> : vector<8xf32>
    %71 = vector.multi_reduction <add>, %70, %cst_33 [1] : vector<8x128xf32> to vector<8xf32>
    %72 = vector.shape_cast %71 : vector<8xf32> to vector<8x1xf32>
    %73 = vector.broadcast %72 : vector<8x1xf32> to vector<8x128xf32>
    %74 = arith.divf %70, %73 : vector<8x128xf32>
    %c0_34 = arith.constant 0 : index
    %c0_35 = arith.constant 0 : index
    %75 = vector.load %arg6[%c0_34, %c0_35] : memref<8x128xf32, #tpu.memory_space<vmem>>, vector<8x128xf32>
    tpu.vector_store %arg6[%c0_34, %c0_35], %74 {strides = array<i32>} : memref<8x128xf32, #tpu.memory_space<vmem>>, vector<8x128xf32>,
    return
  }
  func.func @transform_0(%arg0: i32) -> (i32, i32, i32) {
    %c0_i32 = arith.constant 0 : i32
    %c0_i32_0 = arith.constant 0 : i32
    %c0_i32_1 = arith.constant 0 : i32
    return %c0_i32, %arg0, %c0_i32_0 : i32, i32, i32
  }
  func.func @transform_1(%arg0: i32) -> (i32, i32) {
    %c0_i32 = arith.constant 0 : i32
    %c0_i32_0 = arith.constant 0 : i32
    %c0_i32_1 = arith.constant 0 : i32
    return %c0_i32, %c0_i32_0 : i32, i32
  }
  func.func @transform_2(%arg0: i32) -> (i32, i32) {
    %c0_i32 = arith.constant 0 : i32
    %c0_i32_0 = arith.constant 0 : i32
    %c0_i32_1 = arith.constant 0 : i32
    return %c0_i32, %c0_i32_0 : i32, i32
  }
  func.func @transform_3(%arg0: i32) -> (i32, i32) {
    %c0_i32 = arith.constant 0 : i32
    %c0_i32_0 = arith.constant 0 : i32
    %c0_i32_1 = arith.constant 0 : i32
    return %c0_i32, %c0_i32_0 : i32, i32
  }
  func.func @transform_4(%arg0: i32) -> (i32, i32) {
    %c0_i32 = arith.constant 0 : i32
    %c0_i32_0 = arith.constant 0 : i32
    %c0_i32_1 = arith.constant 0 : i32
    return %c0_i32, %c0_i32_0 : i32, i32
  }
  func.func @transform_5(%arg0: i32) -> (i32, i32) {
    %c0_i32 = arith.constant 0 : i32
    %c0_i32_0 = arith.constant 0 : i32
    return %arg0, %c0_i32 : i32, i32
  }
}

</mosaic_0001>

<llo_original>
// kernel: tpu_custom_call.1
$region0: #{tpu_custom_call.1}
  #allocation0 [shape = 'u32[]', space=smem, size = 0x4, offset = 0x4, fixed_abs, tag = 'smem constant byte address 0x4 - core index']
  #allocation1 [shape = 'u32[144,128]{1,0:T(1,128)}', space=vmem, size = 0x12000, scoped, tag = 'internal scratch']
  %s0 = inlined_call_operand.hbm [shape: f32[8,8,128], index: 0, kind: input, shape index: {}]
  %s1 = inlined_call_operand.hbm [shape: f32[128,128], index: 1, kind: input, shape index: {}]
  %s2 = inlined_call_operand.vmem [shape: f32[1,128], index: 2, kind: input, shape index: {}]
  %s3 = inlined_call_operand.hbm [shape: f32[128,128], index: 3, kind: input, shape index: {}]
  %s4 = inlined_call_operand.vmem [shape: f32[1,128], index: 4, kind: input, shape index: {}]
  %s5 = inlined_call_operand.hbm [shape: f32[8,128], index: 5, kind: output, shape index: {}]
  %s6 = sld [smem:[#allocation0]]
  $region42: #{tpu_custom_call.1} parent=0
    _
  %s8 = ssub.s32 1, %s6
  %s9 = scalar_select 0, %s8, %s6
  $region1: #{tpu_custom_call.1} parent=0
    #allocation2 [shape = 'u8[32768]{0}', space=vmem, size = 0x8000, scoped, tag = 'input window, operand 0, single buffered']
    #allocation3 [shape = 's32[1]{0}', space=sflag, size = 0x4, scoped, tag = 'scoped memory for tpu_custom_call.1']
    #allocation4 [shape = 's32[1]{0}', space=sflag, size = 0x4, scoped, tag = 'scoped memory for tpu_custom_call.1']
    #allocation5 [shape = 'u8[65536]{0}', space=vmem, size = 0x10000, scoped, tag = 'input window, operand 1, single buffered']
    #allocation6 [shape = 's32[1]{0}', space=sflag, size = 0x4, scoped, tag = 'scoped memory for tpu_custom_call.1']
    #allocation7 [shape = 'u8[65536]{0}', space=vmem, size = 0x10000, scoped, tag = 'input window, operand 3, single buffered']
    #allocation8 [shape = 'u8[4096]{0}', space=vmem, size = 0x1000, scoped, tag = 'output window, operand 0, single buffered']
    %10 = vsyncpa [#allocation3], 0
    %11 = vsyncpa [#allocation6], 0
    %12 = vsyncpa [#allocation4], 0
    // Predicated region
    $region2: #{tpu_custom_call.1} parent=1 // pred_check
      _
    $region3: #{tpu_custom_call.1} parent=1 // pred_check_branch
      %14 = sbr.rel (0) target = $region5
    $region4: #{tpu_custom_call.1} parent=1 // pred_region
      %s16 = ssub.s32 1024, 1024
      %17 = vsyncadd [#allocation3], %s16
      %s18 = sshll.u32 [#allocation2], 4
      %s19 = int_to_ptr.vmem [resolvable:$true] %s18
      %24 = dma.hbm_to_vmem [thread:$0]  %s0, 1024, %s19, [#allocation3], 128, 128, 8
    $region5: #{tpu_custom_call.1} parent=1 // pred_fallthru
      _
    // Predicated region
    $region6: #{tpu_custom_call.1} parent=1 // pred_check
      _
    $region7: #{tpu_custom_call.1} parent=1 // pred_check_branch
      %26 = sbr.rel (0) target = $region9
    $region8: #{tpu_custom_call.1} parent=1 // pred_region
      %s28 = ssub.s32 2048, 2048
      %29 = vsyncadd [#allocation6], %s28
      %s30 = sshll.u32 [#allocation5], 4
      %s31 = int_to_ptr.vmem [resolvable:$true] %s30
      %36 = dma.hbm_to_vmem [thread:$0]  %s1, 2048, %s31, [#allocation6], 128, 128, 8
    $region9: #{tpu_custom_call.1} parent=1 // pred_fallthru
      _
    // Predicated region
    $region10: #{tpu_custom_call.1} parent=1 // pred_check
      _
    $region11: #{tpu_custom_call.1} parent=1 // pred_check_branch
      %38 = sbr.rel (0) target = $region13
    $region12: #{tpu_custom_call.1} parent=1 // pred_region
      _
    $region13: #{tpu_custom_call.1} parent=1 // pred_fallthru
      _
    // Predicated region
    $region14: #{tpu_custom_call.1} parent=1 // pred_check
      _
    $region15: #{tpu_custom_call.1} parent=1 // pred_check_branch
      %40 = sbr.rel (0) target = $region17
    $region16: #{tpu_custom_call.1} parent=1 // pred_region
      %s42 = ssub.s32 2048, 2048
      %43 = vsyncadd [#allocation6], %s42
      %s44 = sshll.u32 [#allocation7], 4
      %s45 = int_to_ptr.vmem [resolvable:$true] %s44
      %50 = dma.hbm_to_vmem [thread:$0]  %s3, 2048, %s45, [#allocation6], 128, 128, 8
    $region17: #{tpu_custom_call.1} parent=1 // pred_fallthru
      _
    // Predicated region
    $region18: #{tpu_custom_call.1} parent=1 // pred_check
      _
    $region19: #{tpu_custom_call.1} parent=1 // pred_check_branch
      %52 = sbr.rel (0) target = $region21
    $region20: #{tpu_custom_call.1} parent=1 // pred_region
      _
    $region21: #{tpu_custom_call.1} parent=1 // pred_fallthru
      _
    // Predicated region
    $region22: #{tpu_custom_call.1} parent=1 // pred_check
      _
    $region23: #{tpu_custom_call.1} parent=1 // pred_check_branch
      %54 = sbr.rel (0) target = $region25
    $region24: #{tpu_custom_call.1} parent=1 // pred_region
      %55 = dma.done [#allocation3], 1024
    $region25: #{tpu_custom_call.1} parent=1 // pred_fallthru
      _
    // Predicated region
    $region26: #{tpu_custom_call.1} parent=1 // pred_check
      _
    $region27: #{tpu_custom_call.1} parent=1 // pred_check_branch
      %57 = sbr.rel (0) target = $region29
    $region28: #{tpu_custom_call.1} parent=1 // pred_region
      %58 = dma.done [#allocation6], 2048
    $region29: #{tpu_custom_call.1} parent=1 // pred_fallthru
      _
    // Predicated region
    $region30: #{tpu_custom_call.1} parent=1 // pred_check
      _
    $region31: #{tpu_custom_call.1} parent=1 // pred_check_branch
      %60 = sbr.rel (0) target = $region33
    $region32: #{tpu_custom_call.1} parent=1 // pred_region
      %61 = dma.done [#allocation6], 2048
    $region33: #{tpu_custom_call.1} parent=1 // pred_fallthru
      _
    %v62 = vld [vmem:[#allocation5] sm:$0xff]
    %v63 = vld [vmem:[#allocation5 + $0x8] sm:$0xff]
    %v64 = vld [vmem:[#allocation5 + $0x10] sm:$0xff]
    %v65 = vld [vmem:[#allocation5 + $0x18] sm:$0xff]
    %v66 = vld [vmem:[#allocation5 + $0x20] sm:$0xff]
    %v67 = vld [vmem:[#allocation5 + $0x28] sm:$0xff]
    %v68 = vld [vmem:[#allocation5 + $0x30] sm:$0xff]
    %v69 = vld [vmem:[#allocation5 + $0x38] sm:$0xff]
    %v70 = vld [vmem:[#allocation5 + $0x40] sm:$0xff]
    %v71 = vld [vmem:[#allocation5 + $0x48] sm:$0xff]
    %v72 = vld [vmem:[#allocation5 + $0x50] sm:$0xff]
    %v73 = vld [vmem:[#allocation5 + $0x58] sm:$0xff]
    %v74 = vld [vmem:[#allocation5 + $0x60] sm:$0xff]
    %v75 = vld [vmem:[#allocation5 + $0x68] sm:$0xff]
    %v76 = vld [vmem:[#allocation5 + $0x70] sm:$0xff]
    %v77 = vld [vmem:[#allocation5 + $0x78] sm:$0xff]
    %v78 = vld [vmem:[%s2] sm:$0x1]
    %v80 = vlaneseq
    %v81 = vshrl.u32 %v80, 7
    %v82 = vsub.s32 0, %v81
    %v83 = vrot.slane %v78, %v82
    %v85 = vld [vmem:[#allocation2] sm:$0xff]
    %86 = vmatprep.subr.mxu0 0.0
    %87 = vmatpush1.msra.mxu0 %v62
    %88 = vmatprep.subr.mxu0 0.0
    %89 = vmatpush1.msra.mxu0 %v63
    %90 = vmatprep.subr.mxu0 0.0
    %91 = vmatpush1.msra.mxu0 %v64
    %92 = vmatprep.subr.mxu0 0.0
    %93 = vmatpush1.msra.mxu0 %v65
    %94 = vmatprep.subr.mxu0 0.0
    %95 = vmatpush1.msra.mxu0 %v66
    %96 = vmatprep.subr.mxu0 0.0
    %97 = vmatpush1.msra.mxu0 %v67
    %98 = vmatprep.subr.mxu0 0.0
    %99 = vmatpush1.msra.mxu0 %v68
    %100 = vmatprep.subr.mxu0 0.0
    %101 = vmatpush1.msra.mxu0 %v69
    %102 = vmatprep.subr.mxu0 0.0
    %103 = vmatpush1.msra.mxu0 %v70
    %104 = vmatprep.subr.mxu0 0.0
    %105 = vmatpush1.msra.mxu0 %v71
    %106 = vmatprep.subr.mxu0 0.0
    %107 = vmatpush1.msra.mxu0 %v72
    %108 = vmatprep.subr.mxu0 0.0
    %109 = vmatpush1.msra.mxu0 %v73
    %110 = vmatprep.subr.mxu0 0.0
    %111 = vmatpush1.msra.mxu0 %v74
    %112 = vmatprep.subr.mxu0 0.0
    %113 = vmatpush1.msra.mxu0 %v75
    %114 = vmatprep.subr.mxu0 0.0
    %115 = vmatpush1.msra.mxu0 %v76
    %116 = vmatprep.subr.mxu0 0.0
    %117 = vmatpush1.msra.mxu0 %v77
    %118 = vmatprep.subr.mxu0 0.0
    %119 = vmatpush1.msra.mxu0 0.0
    %120 = vmatprep.subr.mxu0 0.0
    %121 = vmatpush1.msra.mxu0 0.0
    %122 = vmatprep.subr.mxu0 0.0
    %123 = vmatpush1.msra.mxu0 0.0
    %124 = vmatprep.subr.mxu0 0.0
    %125 = vmatpush1.msra.mxu0 0.0
    %126 = vmatprep.subr.mxu0 0.0
    %127 = vmatpush1.msra.mxu0 0.0
    %128 = vmatprep.subr.mxu0 0.0
    %129 = vmatpush1.msra.mxu0 0.0
    %130 = vmatprep.subr.mxu0 0.0
    %131 = vmatpush1.msra.mxu0 0.0
    %132 = vmatprep.subr.mxu0 0.0
    %133 = vmatpush1.msra.mxu0 0.0
    %134 = vmatprep.subr.mxu0 0.0
    %135 = vmatpush1.msra.mxu0 0.0
    %136 = vmatprep.subr.mxu0 0.0
    %137 = vmatpush1.msra.mxu0 0.0
    %138 = vmatprep.subr.mxu0 0.0
    %139 = vmatpush1.msra.mxu0 0.0
    %140 = vmatprep.subr.mxu0 0.0
    %141 = vmatpush1.msra.mxu0 0.0
    %142 = vmatprep.subr.mxu0 0.0
    %143 = vmatpush1.msra.mxu0 0.0
    %144 = vmatprep.subr.mxu0 0.0
    %145 = vmatpush1.msra.mxu0 0.0
    %146 = vmatprep.subr.mxu0 0.0
    %147 = vmatpush1.msra.mxu0 0.0
    %148 = vmatprep.subr.mxu0 0.0
    %149 = vmatpush1.msra.mxu0 0.0
    %150 = vmatprep.mubr.f32.mxu0 0.0
    %151 = vmatmul.mubr.f32.gmra.mrb[0].mxu0 0.0
    %v152 = vpop.f32.mrb[0].mxu0
    %v153 = vadd.f32 0.0, %v152
    %v154 = vpop.f32.mrb[0].mxu0
    %155 = vdwg.mxu0
    %v156 = vadd.f32 %v85, %v153
    %v157 = vadd.f32 %v156, %v83
    %v158 = vtanh.pop %v157
    %s159 = scalar_lea.vmem [#allocation2], 8
    %v160 = vld [vmem:[%s159] sm:$0xff]
    %161 = vmatprep.subr.mxu0 0.0
    %162 = vmatpush1.msra.mxu0 %v62
    %163 = vmatprep.subr.mxu0 0.0
    %164 = vmatpush1.msra.mxu0 %v63
    %165 = vmatprep.subr.mxu0 0.0
    %166 = vmatpush1.msra.mxu0 %v64
    %167 = vmatprep.subr.mxu0 0.0
    %168 = vmatpush1.msra.mxu0 %v65
    %169 = vmatprep.subr.mxu0 0.0
    %170 = vmatpush1.msra.mxu0 %v66
    %171 = vmatprep.subr.mxu0 0.0
    %172 = vmatpush1.msra.mxu0 %v67
    %173 = vmatprep.subr.mxu0 0.0
    %174 = vmatpush1.msra.mxu0 %v68
    %175 = vmatprep.subr.mxu0 0.0
    %176 = vmatpush1.msra.mxu0 %v69
    %177 = vmatprep.subr.mxu0 0.0
    %178 = vmatpush1.msra.mxu0 %v70
    %179 = vmatprep.subr.mxu0 0.0
    %180 = vmatpush1.msra.mxu0 %v71
    %181 = vmatprep.subr.mxu0 0.0
    %182 = vmatpush1.msra.mxu0 %v72
    %183 = vmatprep.subr.mxu0 0.0
    %184 = vmatpush1.msra.mxu0 %v73
    %185 = vmatprep.subr.mxu0 0.0
    %186 = vmatpush1.msra.mxu0 %v74
    %187 = vmatprep.subr.mxu0 0.0
    %188 = vmatpush1.msra.mxu0 %v75
    %189 = vmatprep.subr.mxu0 0.0
    %190 = vmatpush1.msra.mxu0 %v76
    %191 = vmatprep.subr.mxu0 0.0
    %192 = vmatpush1.msra.mxu0 %v77
    %193 = vmatprep.subr.mxu0 0.0
    %194 = vmatpush1.msra.mxu0 0.0
    %195 = vmatprep.subr.mxu0 0.0
    %196 = vmatpush1.msra.mxu0 0.0
    %197 = vmatprep.subr.mxu0 0.0
    %198 = vmatpush1.msra.mxu0 0.0
    %199 = vmatprep.subr.mxu0 0.0
    %200 = vmatpush1.msra.mxu0 0.0
    %201 = vmatprep.subr.mxu0 0.0
    %202 = vmatpush1.msra.mxu0 0.0
    %203 = vmatprep.subr.mxu0 0.0
    %204 = vmatpush1.msra.mxu0 0.0
    %205 = vmatprep.subr.mxu0 0.0
    %206 = vmatpush1.msra.mxu0 0.0
    %207 = vmatprep.subr.mxu0 0.0
    %208 = vmatpush1.msra.mxu0 0.0
    %209 = vmatprep.subr.mxu0 0.0
    %210 = vmatpush1.msra.mxu0 0.0
    %211 = vmatprep.subr.mxu0 0.0
    %212 = vmatpush1.msra.mxu0 0.0
    %213 = vmatprep.subr.mxu0 0.0
    %214 = vmatpush1.msra.mxu0 0.0
    %215 = vmatprep.subr.mxu0 0.0
    %216 = vmatpush1.msra.mxu0 0.0
    %217 = vmatprep.subr.mxu0 0.0
    %218 = vmatpush1.msra.mxu0 0.0
    %219 = vmatprep.subr.mxu0 0.0
    %220 = vmatpush1.msra.mxu0 0.0
    %221 = vmatprep.subr.mxu0 0.0
    %222 = vmatpush1.msra.mxu0 0.0
    %223 = vmatprep.subr.mxu0 0.0
    %224 = vmatpush1.msra.mxu0 0.0
    %225 = vmatprep.mubr.f32.mxu0 0.0
    %226 = vmatmul.mubr.f32.gmra.mrb[0].mxu0 %v158
    %v227 = vpop.f32.mrb[0].mxu0
    %v228 = vadd.f32 0.0, %v227
    %v229 = vpop.f32.mrb[0].mxu0
    %230 = vdwg.mxu0
    %v231 = vadd.f32 %v160, %v228
    %v232 = vadd.f32 %v231, %v83
    %v233 = vtanh.pop %v232
    %s234 = scalar_lea.vmem [#allocation2], 16
    %v235 = vld [vmem:[%s234] sm:$0xff]
    %236 = vmatprep.subr.mxu0 0.0
    %237 = vmatpush1.msra.mxu0 %v62
    %238 = vmatprep.subr.mxu0 0.0
    %239 = vmatpush1.msra.mxu0 %v63
    %240 = vmatprep.subr.mxu0 0.0
    %241 = vmatpush1.msra.mxu0 %v64
    %242 = vmatprep.subr.mxu0 0.0
    %243 = vmatpush1.msra.mxu0 %v65
    %244 = vmatprep.subr.mxu0 0.0
    %245 = vmatpush1.msra.mxu0 %v66
    %246 = vmatprep.subr.mxu0 0.0
    %247 = vmatpush1.msra.mxu0 %v67
    %248 = vmatprep.subr.mxu0 0.0
    %249 = vmatpush1.msra.mxu0 %v68
    %250 = vmatprep.subr.mxu0 0.0
    %251 = vmatpush1.msra.mxu0 %v69
    %252 = vmatprep.subr.mxu0 0.0
    %253 = vmatpush1.msra.mxu0 %v70
    %254 = vmatprep.subr.mxu0 0.0
    %255 = vmatpush1.msra.mxu0 %v71
    %256 = vmatprep.subr.mxu0 0.0
    %257 = vmatpush1.msra.mxu0 %v72
    %258 = vmatprep.subr.mxu0 0.0
    %259 = vmatpush1.msra.mxu0 %v73
    %260 = vmatprep.subr.mxu0 0.0
    %261 = vmatpush1.msra.mxu0 %v74
    %262 = vmatprep.subr.mxu0 0.0
    %263 = vmatpush1.msra.mxu0 %v75
    %264 = vmatprep.subr.mxu0 0.0
    %265 = vmatpush1.msra.mxu0 %v76
    %266 = vmatprep.subr.mxu0 0.0
    %267 = vmatpush1.msra.mxu0 %v77
    %268 = vmatprep.subr.mxu0 0.0
    %269 = vmatpush1.msra.mxu0 0.0
    %270 = vmatprep.subr.mxu0 0.0
    %271 = vmatpush1.msra.mxu0 0.0
    %272 = vmatprep.subr.mxu0 0.0
    %273 = vmatpush1.msra.mxu0 0.0
    %274 = vmatprep.subr.mxu0 0.0
    %275 = vmatpush1.msra.mxu0 0.0
    %276 = vmatprep.subr.mxu0 0.0
    %277 = vmatpush1.msra.mxu0 0.0
    %278 = vmatprep.subr.mxu0 0.0
    %279 = vmatpush1.msra.mxu0 0.0
    %280 = vmatprep.subr.mxu0 0.0
    %281 = vmatpush1.msra.mxu0 0.0
    %282 = vmatprep.subr.mxu0 0.0
    %283 = vmatpush1.msra.mxu0 0.0
    %284 = vmatprep.subr.mxu0 0.0
    %285 = vmatpush1.msra.mxu0 0.0
    %286 = vmatprep.subr.mxu0 0.0
    %287 = vmatpush1.msra.mxu0 0.0
    %288 = vmatprep.subr.mxu0 0.0
    %289 = vmatpush1.msra.mxu0 0.0
    %290 = vmatprep.subr.mxu0 0.0
    %291 = vmatpush1.msra.mxu0 0.0
    %292 = vmatprep.subr.mxu0 0.0
    %293 = vmatpush1.msra.mxu0 0.0
    %294 = vmatprep.subr.mxu0 0.0
    %295 = vmatpush1.msra.mxu0 0.0
    %296 = vmatprep.subr.mxu0 0.0
    %297 = vmatpush1.msra.mxu0 0.0
    %298 = vmatprep.subr.mxu0 0.0
    %299 = vmatpush1.msra.mxu0 0.0
    %300 = vmatprep.mubr.f32.mxu0 0.0
    %301 = vmatmul.mubr.f32.gmra.mrb[0].mxu0 %v233
    %v302 = vpop.f32.mrb[0].mxu0
    %v303 = vadd.f32 0.0, %v302
    %v304 = vpop.f32.mrb[0].mxu0
    %305 = vdwg.mxu0
    %v306 = vadd.f32 %v235, %v303
    %v307 = vadd.f32 %v306, %v83
    %v308 = vtanh.pop %v307
    %s309 = scalar_lea.vmem [#allocation2], 24
    %v310 = vld [vmem:[%s309] sm:$0xff]
    %311 = vmatprep.subr.mxu0 0.0
    %312 = vmatpush1.msra.mxu0 %v62
    %313 = vmatprep.subr.mxu0 0.0
    %314 = vmatpush1.msra.mxu0 %v63
    %315 = vmatprep.subr.mxu0 0.0
    %316 = vmatpush1.msra.mxu0 %v64
    %317 = vmatprep.subr.mxu0 0.0
    %318 = vmatpush1.msra.mxu0 %v65
    %319 = vmatprep.subr.mxu0 0.0
    %320 = vmatpush1.msra.mxu0 %v66
    %321 = vmatprep.subr.mxu0 0.0
    %322 = vmatpush1.msra.mxu0 %v67
    %323 = vmatprep.subr.mxu0 0.0
    %324 = vmatpush1.msra.mxu0 %v68
    %325 = vmatprep.subr.mxu0 0.0
    %326 = vmatpush1.msra.mxu0 %v69
    %327 = vmatprep.subr.mxu0 0.0
    %328 = vmatpush1.msra.mxu0 %v70
    %329 = vmatprep.subr.mxu0 0.0
    %330 = vmatpush1.msra.mxu0 %v71
    %331 = vmatprep.subr.mxu0 0.0
    %332 = vmatpush1.msra.mxu0 %v72
    %333 = vmatprep.subr.mxu0 0.0
    %334 = vmatpush1.msra.mxu0 %v73
    %335 = vmatprep.subr.mxu0 0.0
    %336 = vmatpush1.msra.mxu0 %v74
    %337 = vmatprep.subr.mxu0 0.0
    %338 = vmatpush1.msra.mxu0 %v75
    %339 = vmatprep.subr.mxu0 0.0
    %340 = vmatpush1.msra.mxu0 %v76
    %341 = vmatprep.subr.mxu0 0.0
    %342 = vmatpush1.msra.mxu0 %v77
    %343 = vmatprep.subr.mxu0 0.0
    %344 = vmatpush1.msra.mxu0 0.0
    %345 = vmatprep.subr.mxu0 0.0
    %346 = vmatpush1.msra.mxu0 0.0
    %347 = vmatprep.subr.mxu0 0.0
    %348 = vmatpush1.msra.mxu0 0.0
    %349 = vmatprep.subr.mxu0 0.0
    %350 = vmatpush1.msra.mxu0 0.0
    %351 = vmatprep.subr.mxu0 0.0
    %352 = vmatpush1.msra.mxu0 0.0
    %353 = vmatprep.subr.mxu0 0.0
    %354 = vmatpush1.msra.mxu0 0.0
    %355 = vmatprep.subr.mxu0 0.0
    %356 = vmatpush1.msra.mxu0 0.0
    %357 = vmatprep.subr.mxu0 0.0
    %358 = vmatpush1.msra.mxu0 0.0
    %359 = vmatprep.subr.mxu0 0.0
    %360 = vmatpush1.msra.mxu0 0.0
    %361 = vmatprep.subr.mxu0 0.0
    %362 = vmatpush1.msra.mxu0 0.0
    %363 = vmatprep.subr.mxu0 0.0
    %364 = vmatpush1.msra.mxu0 0.0
    %365 = vmatprep.subr.mxu0 0.0
    %366 = vmatpush1.msra.mxu0 0.0
    %367 = vmatprep.subr.mxu0 0.0
    %368 = vmatpush1.msra.mxu0 0.0
    %369 = vmatprep.subr.mxu0 0.0
    %370 = vmatpush1.msra.mxu0 0.0
    %371 = vmatprep.subr.mxu0 0.0
    %372 = vmatpush1.msra.mxu0 0.0
    %373 = vmatprep.subr.mxu0 0.0
    %374 = vmatpush1.msra.mxu0 0.0
    %375 = vmatprep.mubr.f32.mxu0 0.0
    %376 = vmatmul.mubr.f32.gmra.mrb[0].mxu0 %v308
    %v377 = vpop.f32.mrb[0].mxu0
    %v378 = vadd.f32 0.0, %v377
    %v379 = vpop.f32.mrb[0].mxu0
    %380 = vdwg.mxu0
    %v381 = vadd.f32 %v310, %v378
    %v382 = vadd.f32 %v381, %v83
    %v383 = vtanh.pop %v382
    %s384 = scalar_lea.vmem [#allocation2], 32
    %v385 = vld [vmem:[%s384] sm:$0xff]
    %386 = vmatprep.subr.mxu0 0.0
    %387 = vmatpush1.msra.mxu0 %v62
    %388 = vmatprep.subr.mxu0 0.0
    %389 = vmatpush1.msra.mxu0 %v63
    %390 = vmatprep.subr.mxu0 0.0
    %391 = vmatpush1.msra.mxu0 %v64
    %392 = vmatprep.subr.mxu0 0.0
    %393 = vmatpush1.msra.mxu0 %v65
    %394 = vmatprep.subr.mxu0 0.0
    %395 = vmatpush1.msra.mxu0 %v66
    %396 = vmatprep.subr.mxu0 0.0
    %397 = vmatpush1.msra.mxu0 %v67
    %398 = vmatprep.subr.mxu0 0.0
    %399 = vmatpush1.msra.mxu0 %v68
    %400 = vmatprep.subr.mxu0 0.0
    %401 = vmatpush1.msra.mxu0 %v69
    %402 = vmatprep.subr.mxu0 0.0
    %403 = vmatpush1.msra.mxu0 %v70
    %404 = vmatprep.subr.mxu0 0.0
    %405 = vmatpush1.msra.mxu0 %v71
    %406 = vmatprep.subr.mxu0 0.0
    %407 = vmatpush1.msra.mxu0 %v72
    %408 = vmatprep.subr.mxu0 0.0
    %409 = vmatpush1.msra.mxu0 %v73
    %410 = vmatprep.subr.mxu0 0.0
    %411 = vmatpush1.msra.mxu0 %v74
    %412 = vmatprep.subr.mxu0 0.0
    %413 = vmatpush1.msra.mxu0 %v75
    %414 = vmatprep.subr.mxu0 0.0
    %415 = vmatpush1.msra.mxu0 %v76
    %416 = vmatprep.subr.mxu0 0.0
    %417 = vmatpush1.msra.mxu0 %v77
    %418 = vmatprep.subr.mxu0 0.0
    %419 = vmatpush1.msra.mxu0 0.0
    %420 = vmatprep.subr.mxu0 0.0
    %421 = vmatpush1.msra.mxu0 0.0
    %422 = vmatprep.subr.mxu0 0.0
    %423 = vmatpush1.msra.mxu0 0.0
    %424 = vmatprep.subr.mxu0 0.0
    %425 = vmatpush1.msra.mxu0 0.0
    %426 = vmatprep.subr.mxu0 0.0
    %427 = vmatpush1.msra.mxu0 0.0
    %428 = vmatprep.subr.mxu0 0.0
    %429 = vmatpush1.msra.mxu0 0.0
    %430 = vmatprep.subr.mxu0 0.0
    %431 = vmatpush1.msra.mxu0 0.0
    %432 = vmatprep.subr.mxu0 0.0
    %433 = vmatpush1.msra.mxu0 0.0
    %434 = vmatprep.subr.mxu0 0.0
    %435 = vmatpush1.msra.mxu0 0.0
    %436 = vmatprep.subr.mxu0 0.0
    %437 = vmatpush1.msra.mxu0 0.0
    %438 = vmatprep.subr.mxu0 0.0
    %439 = vmatpush1.msra.mxu0 0.0
    %440 = vmatprep.subr.mxu0 0.0
    %441 = vmatpush1.msra.mxu0 0.0
    %442 = vmatprep.subr.mxu0 0.0
    %443 = vmatpush1.msra.mxu0 0.0
    %444 = vmatprep.subr.mxu0 0.0
    %445 = vmatpush1.msra.mxu0 0.0
    %446 = vmatprep.subr.mxu0 0.0
    %447 = vmatpush1.msra.mxu0 0.0
    %448 = vmatprep.subr.mxu0 0.0
    %449 = vmatpush1.msra.mxu0 0.0
    %450 = vmatprep.mubr.f32.mxu0 0.0
    %451 = vmatmul.mubr.f32.gmra.mrb[0].mxu0 %v383
    %v452 = vpop.f32.mrb[0].mxu0
    %v453 = vadd.f32 0.0, %v452
    %v454 = vpop.f32.mrb[0].mxu0
    %455 = vdwg.mxu0
    %v456 = vadd.f32 %v385, %v453
    %v457 = vadd.f32 %v456, %v83
    %v458 = vtanh.pop %v457
    %s459 = scalar_lea.vmem [#allocation2], 40
    %v460 = vld [vmem:[%s459] sm:$0xff]
    %461 = vmatprep.subr.mxu0 0.0
    %462 = vmatpush1.msra.mxu0 %v62
    %463 = vmatprep.subr.mxu0 0.0
    %464 = vmatpush1.msra.mxu0 %v63
    %465 = vmatprep.subr.mxu0 0.0
    %466 = vmatpush1.msra.mxu0 %v64
    %467 = vmatprep.subr.mxu0 0.0
    %468 = vmatpush1.msra.mxu0 %v65
    %469 = vmatprep.subr.mxu0 0.0
    %470 = vmatpush1.msra.mxu0 %v66
    %471 = vmatprep.subr.mxu0 0.0
    %472 = vmatpush1.msra.mxu0 %v67
    %473 = vmatprep.subr.mxu0 0.0
    %474 = vmatpush1.msra.mxu0 %v68
    %475 = vmatprep.subr.mxu0 0.0
    %476 = vmatpush1.msra.mxu0 %v69
    %477 = vmatprep.subr.mxu0 0.0
    %478 = vmatpush1.msra.mxu0 %v70
    %479 = vmatprep.subr.mxu0 0.0
    %480 = vmatpush1.msra.mxu0 %v71
    %481 = vmatprep.subr.mxu0 0.0
    %482 = vmatpush1.msra.mxu0 %v72
    %483 = vmatprep.subr.mxu0 0.0
    %484 = vmatpush1.msra.mxu0 %v73
    %485 = vmatprep.subr.mxu0 0.0
    %486 = vmatpush1.msra.mxu0 %v74
    %487 = vmatprep.subr.mxu0 0.0
    %488 = vmatpush1.msra.mxu0 %v75
    %489 = vmatprep.subr.mxu0 0.0
    %490 = vmatpush1.msra.mxu0 %v76
    %491 = vmatprep.subr.mxu0 0.0
    %492 = vmatpush1.msra.mxu0 %v77
    %493 = vmatprep.subr.mxu0 0.0
    %494 = vmatpush1.msra.mxu0 0.0
    %495 = vmatprep.subr.mxu0 0.0
    %496 = vmatpush1.msra.mxu0 0.0
    %497 = vmatprep.subr.mxu0 0.0
    %498 = vmatpush1.msra.mxu0 0.0
    %499 = vmatprep.subr.mxu0 0.0
    %500 = vmatpush1.msra.mxu0 0.0
    %501 = vmatprep.subr.mxu0 0.0
    %502 = vmatpush1.msra.mxu0 0.0
    %503 = vmatprep.subr.mxu0 0.0
    %504 = vmatpush1.msra.mxu0 0.0
    %505 = vmatprep.subr.mxu0 0.0
    %506 = vmatpush1.msra.mxu0 0.0
    %507 = vmatprep.subr.mxu0 0.0
    %508 = vmatpush1.msra.mxu0 0.0
    %509 = vmatprep.subr.mxu0 0.0
    %510 = vmatpush1.msra.mxu0 0.0
    %511 = vmatprep.subr.mxu0 0.0
    %512 = vmatpush1.msra.mxu0 0.0
    %513 = vmatprep.subr.mxu0 0.0
    %514 = vmatpush1.msra.mxu0 0.0
    %515 = vmatprep.subr.mxu0 0.0
    %516 = vmatpush1.msra.mxu0 0.0
    %517 = vmatprep.subr.mxu0 0.0
    %518 = vmatpush1.msra.mxu0 0.0
    %519 = vmatprep.subr.mxu0 0.0
    %520 = vmatpush1.msra.mxu0 0.0
    %521 = vmatprep.subr.mxu0 0.0
    %522 = vmatpush1.msra.mxu0 0.0
    %523 = vmatprep.subr.mxu0 0.0
    %524 = vmatpush1.msra.mxu0 0.0
    %525 = vmatprep.mubr.f32.mxu0 0.0
    %526 = vmatmul.mubr.f32.gmra.mrb[0].mxu0 %v458
    %v527 = vpop.f32.mrb[0].mxu0
    %v528 = vadd.f32 0.0, %v527
    %v529 = vpop.f32.mrb[0].mxu0
    %530 = vdwg.mxu0
    %v531 = vadd.f32 %v460, %v528
    %v532 = vadd.f32 %v531, %v83
    %v533 = vtanh.pop %v532
    %s534 = scalar_lea.vmem [#allocation2], 48
    %v535 = vld [vmem:[%s534] sm:$0xff]
    %536 = vmatprep.subr.mxu0 0.0
    %537 = vmatpush1.msra.mxu0 %v62
    %538 = vmatprep.subr.mxu0 0.0
    %539 = vmatpush1.msra.mxu0 %v63
    %540 = vmatprep.subr.mxu0 0.0
    %541 = vmatpush1.msra.mxu0 %v64
    %542 = vmatprep.subr.mxu0 0.0
    %543 = vmatpush1.msra.mxu0 %v65
    %544 = vmatprep.subr.mxu0 0.0
    %545 = vmatpush1.msra.mxu0 %v66
    %546 = vmatprep.subr.mxu0 0.0
    %547 = vmatpush1.msra.mxu0 %v67
    %548 = vmatprep.subr.mxu0 0.0
    %549 = vmatpush1.msra.mxu0 %v68
    %550 = vmatprep.subr.mxu0 0.0
    %551 = vmatpush1.msra.mxu0 %v69
    %552 = vmatprep.subr.mxu0 0.0
    %553 = vmatpush1.msra.mxu0 %v70
    %554 = vmatprep.subr.mxu0 0.0
    %555 = vmatpush1.msra.mxu0 %v71
    %556 = vmatprep.subr.mxu0 0.0
    %557 = vmatpush1.msra.mxu0 %v72
    %558 = vmatprep.subr.mxu0 0.0
    %559 = vmatpush1.msra.mxu0 %v73
    %560 = vmatprep.subr.mxu0 0.0
    %561 = vmatpush1.msra.mxu0 %v74
    %562 = vmatprep.subr.mxu0 0.0
    %563 = vmatpush1.msra.mxu0 %v75
    %564 = vmatprep.subr.mxu0 0.0
    %565 = vmatpush1.msra.mxu0 %v76
    %566 = vmatprep.subr.mxu0 0.0
    %567 = vmatpush1.msra.mxu0 %v77
    %568 = vmatprep.subr.mxu0 0.0
    %569 = vmatpush1.msra.mxu0 0.0
    %570 = vmatprep.subr.mxu0 0.0
    %571 = vmatpush1.msra.mxu0 0.0
    %572 = vmatprep.subr.mxu0 0.0
    %573 = vmatpush1.msra.mxu0 0.0
    %574 = vmatprep.subr.mxu0 0.0
    %575 = vmatpush1.msra.mxu0 0.0
    %576 = vmatprep.subr.mxu0 0.0
    %577 = vmatpush1.msra.mxu0 0.0
    %578 = vmatprep.subr.mxu0 0.0
    %579 = vmatpush1.msra.mxu0 0.0
    %580 = vmatprep.subr.mxu0 0.0
    %581 = vmatpush1.msra.mxu0 0.0
    %582 = vmatprep.subr.mxu0 0.0
    %583 = vmatpush1.msra.mxu0 0.0
    %584 = vmatprep.subr.mxu0 0.0
    %585 = vmatpush1.msra.mxu0 0.0
    %586 = vmatprep.subr.mxu0 0.0
    %587 = vmatpush1.msra.mxu0 0.0
    %588 = vmatprep.subr.mxu0 0.0
    %589 = vmatpush1.msra.mxu0 0.0
    %590 = vmatprep.subr.mxu0 0.0
    %591 = vmatpush1.msra.mxu0 0.0
    %592 = vmatprep.subr.mxu0 0.0
    %593 = vmatpush1.msra.mxu0 0.0
    %594 = vmatprep.subr.mxu0 0.0
    %595 = vmatpush1.msra.mxu0 0.0
    %596 = vmatprep.subr.mxu0 0.0
    %597 = vmatpush1.msra.mxu0 0.0
    %598 = vmatprep.subr.mxu0 0.0
    %599 = vmatpush1.msra.mxu0 0.0
    %600 = vmatprep.mubr.f32.mxu0 0.0
    %601 = vmatmul.mubr.f32.gmra.mrb[0].mxu0 %v533
    %v602 = vpop.f32.mrb[0].mxu0
    %v603 = vadd.f32 0.0, %v602
    %v604 = vpop.f32.mrb[0].mxu0
    %605 = vdwg.mxu0
    %v606 = vadd.f32 %v535, %v603
    %v607 = vadd.f32 %v606, %v83
    %v608 = vtanh.pop %v607
    %s609 = scalar_lea.vmem [#allocation2], 56
    %v610 = vld [vmem:[%s609] sm:$0xff]
    %611 = vmatprep.subr.mxu0 0.0
    %612 = vmatpush1.msra.mxu0 %v62
    %613 = vmatprep.subr.mxu0 0.0
    %614 = vmatpush1.msra.mxu0 %v63
    %615 = vmatprep.subr.mxu0 0.0
    %616 = vmatpush1.msra.mxu0 %v64
    %617 = vmatprep.subr.mxu0 0.0
    %618 = vmatpush1.msra.mxu0 %v65
    %619 = vmatprep.subr.mxu0 0.0
    %620 = vmatpush1.msra.mxu0 %v66
    %621 = vmatprep.subr.mxu0 0.0
    %622 = vmatpush1.msra.mxu0 %v67
    %623 = vmatprep.subr.mxu0 0.0
    %624 = vmatpush1.msra.mxu0 %v68
    %625 = vmatprep.subr.mxu0 0.0
    %626 = vmatpush1.msra.mxu0 %v69
    %627 = vmatprep.subr.mxu0 0.0
    %628 = vmatpush1.msra.mxu0 %v70
    %629 = vmatprep.subr.mxu0 0.0
    %630 = vmatpush1.msra.mxu0 %v71
    %631 = vmatprep.subr.mxu0 0.0
    %632 = vmatpush1.msra.mxu0 %v72
    %633 = vmatprep.subr.mxu0 0.0
    %634 = vmatpush1.msra.mxu0 %v73
    %635 = vmatprep.subr.mxu0 0.0
    %636 = vmatpush1.msra.mxu0 %v74
    %637 = vmatprep.subr.mxu0 0.0
    %638 = vmatpush1.msra.mxu0 %v75
    %639 = vmatprep.subr.mxu0 0.0
    %640 = vmatpush1.msra.mxu0 %v76
    %641 = vmatprep.subr.mxu0 0.0
    %642 = vmatpush1.msra.mxu0 %v77
    %643 = vmatprep.subr.mxu0 0.0
    %644 = vmatpush1.msra.mxu0 0.0
    %645 = vmatprep.subr.mxu0 0.0
    %646 = vmatpush1.msra.mxu0 0.0
    %647 = vmatprep.subr.mxu0 0.0
    %648 = vmatpush1.msra.mxu0 0.0
    %649 = vmatprep.subr.mxu0 0.0
    %650 = vmatpush1.msra.mxu0 0.0
    %651 = vmatprep.subr.mxu0 0.0
    %652 = vmatpush1.msra.mxu0 0.0
    %653 = vmatprep.subr.mxu0 0.0
    %654 = vmatpush1.msra.mxu0 0.0
    %655 = vmatprep.subr.mxu0 0.0
    %656 = vmatpush1.msra.mxu0 0.0
    %657 = vmatprep.subr.mxu0 0.0
    %658 = vmatpush1.msra.mxu0 0.0
    %659 = vmatprep.subr.mxu0 0.0
    %660 = vmatpush1.msra.mxu0 0.0
    %661 = vmatprep.subr.mxu0 0.0
    %662 = vmatpush1.msra.mxu0 0.0
    %663 = vmatprep.subr.mxu0 0.0
    %664 = vmatpush1.msra.mxu0 0.0
    %665 = vmatprep.subr.mxu0 0.0
    %666 = vmatpush1.msra.mxu0 0.0
    %667 = vmatprep.subr.mxu0 0.0
    %668 = vmatpush1.msra.mxu0 0.0
    %669 = vmatprep.subr.mxu0 0.0
    %670 = vmatpush1.msra.mxu0 0.0
    %671 = vmatprep.subr.mxu0 0.0
    %672 = vmatpush1.msra.mxu0 0.0
    %673 = vmatprep.subr.mxu0 0.0
    %674 = vmatpush1.msra.mxu0 0.0
    %675 = vmatprep.mubr.f32.mxu0 0.0
    %676 = vmatmul.mubr.f32.gmra.mrb[0].mxu0 %v608
    %v677 = vpop.f32.mrb[0].mxu0
    %v678 = vadd.f32 0.0, %v677
    %v679 = vpop.f32.mrb[0].mxu0
    %680 = vdwg.mxu0
    %v681 = vadd.f32 %v610, %v678
    %v682 = vadd.f32 %v681, %v83
    %v683 = vtanh.pop %v682
    %v684 = vld [vmem:[#allocation7] sm:$0xff]
    %v685 = vld [vmem:[#allocation7 + $0x8] sm:$0xff]
    %v686 = vld [vmem:[#allocation7 + $0x10] sm:$0xff]
    %v687 = vld [vmem:[#allocation7 + $0x18] sm:$0xff]
    %v688 = vld [vmem:[#allocation7 + $0x20] sm:$0xff]
    %v689 = vld [vmem:[#allocation7 + $0x28] sm:$0xff]
    %v690 = vld [vmem:[#allocation7 + $0x30] sm:$0xff]
    %v691 = vld [vmem:[#allocation7 + $0x38] sm:$0xff]
    %v692 = vld [vmem:[#allocation7 + $0x40] sm:$0xff]
    %v693 = vld [vmem:[#allocation7 + $0x48] sm:$0xff]
    %v694 = vld [vmem:[#allocation7 + $0x50] sm:$0xff]
    %v695 = vld [vmem:[#allocation7 + $0x58] sm:$0xff]
    %v696 = vld [vmem:[#allocation7 + $0x60] sm:$0xff]
    %v697 = vld [vmem:[#allocation7 + $0x68] sm:$0xff]
    %v698 = vld [vmem:[#allocation7 + $0x70] sm:$0xff]
    %v699 = vld [vmem:[#allocation7 + $0x78] sm:$0xff]
    %v700 = vld [vmem:[%s4] sm:$0x1]
    %v702 = vlaneseq
    %v703 = vshrl.u32 %v702, 7
    %v704 = vsub.s32 0, %v703
    %v705 = vrot.slane %v700, %v704
    %707 = vmatprep.subr.mxu0 0.0
    %708 = vmatpush1.msra.mxu0 %v684
    %709 = vmatprep.subr.mxu0 0.0
    %710 = vmatpush1.msra.mxu0 %v685
    %711 = vmatprep.subr.mxu0 0.0
    %712 = vmatpush1.msra.mxu0 %v686
    %713 = vmatprep.subr.mxu0 0.0
    %714 = vmatpush1.msra.mxu0 %v687
    %715 = vmatprep.subr.mxu0 0.0
    %716 = vmatpush1.msra.mxu0 %v688
    %717 = vmatprep.subr.mxu0 0.0
    %718 = vmatpush1.msra.mxu0 %v689
    %719 = vmatprep.subr.mxu0 0.0
    %720 = vmatpush1.msra.mxu0 %v690
    %721 = vmatprep.subr.mxu0 0.0
    %722 = vmatpush1.msra.mxu0 %v691
    %723 = vmatprep.subr.mxu0 0.0
    %724 = vmatpush1.msra.mxu0 %v692
    %725 = vmatprep.subr.mxu0 0.0
    %726 = vmatpush1.msra.mxu0 %v693
    %727 = vmatprep.subr.mxu0 0.0
    %728 = vmatpush1.msra.mxu0 %v694
    %729 = vmatprep.subr.mxu0 0.0
    %730 = vmatpush1.msra.mxu0 %v695
    %731 = vmatprep.subr.mxu0 0.0
    %732 = vmatpush1.msra.mxu0 %v696
    %733 = vmatprep.subr.mxu0 0.0
    %734 = vmatpush1.msra.mxu0 %v697
    %735 = vmatprep.subr.mxu0 0.0
    %736 = vmatpush1.msra.mxu0 %v698
    %737 = vmatprep.subr.mxu0 0.0
    %738 = vmatpush1.msra.mxu0 %v699
    %739 = vmatprep.subr.mxu0 0.0
    %740 = vmatpush1.msra.mxu0 0.0
    %741 = vmatprep.subr.mxu0 0.0
    %742 = vmatpush1.msra.mxu0 0.0
    %743 = vmatprep.subr.mxu0 0.0
    %744 = vmatpush1.msra.mxu0 0.0
    %745 = vmatprep.subr.mxu0 0.0
    %746 = vmatpush1.msra.mxu0 0.0
    %747 = vmatprep.subr.mxu0 0.0
    %748 = vmatpush1.msra.mxu0 0.0
    %749 = vmatprep.subr.mxu0 0.0
    %750 = vmatpush1.msra.mxu0 0.0
    %751 = vmatprep.subr.mxu0 0.0
    %752 = vmatpush1.msra.mxu0 0.0
    %753 = vmatprep.subr.mxu0 0.0
    %754 = vmatpush1.msra.mxu0 0.0
    %755 = vmatprep.subr.mxu0 0.0
    %756 = vmatpush1.msra.mxu0 0.0
    %757 = vmatprep.subr.mxu0 0.0
    %758 = vmatpush1.msra.mxu0 0.0
    %759 = vmatprep.subr.mxu0 0.0
    %760 = vmatpush1.msra.mxu0 0.0
    %761 = vmatprep.subr.mxu0 0.0
    %762 = vmatpush1.msra.mxu0 0.0
    %763 = vmatprep.subr.mxu0 0.0
    %764 = vmatpush1.msra.mxu0 0.0
    %765 = vmatprep.subr.mxu0 0.0
    %766 = vmatpush1.msra.mxu0 0.0
    %767 = vmatprep.subr.mxu0 0.0
    %768 = vmatpush1.msra.mxu0 0.0
    %769 = vmatprep.subr.mxu0 0.0
    %770 = vmatpush1.msra.mxu0 0.0
    %771 = vmatprep.mubr.f32.mxu0 0.0
    %772 = vmatmul.mubr.f32.gmra.mrb[0].mxu0 %v683
    %v773 = vpop.f32.mrb[0].mxu0
    %v774 = vadd.f32 %v705, %v773
    %v775 = vpop.f32.mrb[0].mxu0
    %776 = vdwg.mxu0
    %777 = vmax.xlane.f32.xlu0 %v774
    %v778 = vpop.xlane.xlu0 %777
    %v779 = vsub.f32 %v774, %v778
    %v780 = vmul.f32 %v779, 1.442695
    %v781 = vpow.pop %v780
    %782 = vadd.xlane.f32.xlu0 %v781
    %v783 = vpop.xlane.xlu0 %782
    %v784 = vrcp.pop %v783
    %v785 = vmul.f32 %v781, %v784
    %786 = vst [vmem:[#allocation8] sm:$0xff] %v785
    // Predicated region
    $region34: #{tpu_custom_call.1} parent=1 // pred_check
      _
    $region35: #{tpu_custom_call.1} parent=1 // pred_check_branch
      %788 = sbr.rel (0) target = $region37
    $region36: #{tpu_custom_call.1} parent=1 // pred_region
      %s790 = ssub.s32 128, 128
      %791 = vsyncadd [#allocation4], %s790
      %s793 = sshll.u32 [#allocation8], 4
      %s794 = int_to_ptr.vmem [resolvable:$true] %s793
      %796 = dma.vmem_to_hbm [thread:$0]  %s794, 128, %s5, [#allocation4]
    $region37: #{tpu_custom_call.1} parent=1 // pred_fallthru
      _
    // Predicated region
    $region38: #{tpu_custom_call.1} parent=1 // pred_check
      _
    $region39: #{tpu_custom_call.1} parent=1 // pred_check_branch
      %798 = sbr.rel (0) target = $region41
    $region40: #{tpu_custom_call.1} parent=1 // pred_region
      %799 = dma.done [#allocation4], 128
    $region41: #{tpu_custom_call.1} parent=1 // pred_fallthru
      _
    %800 = vsyncpa [#allocation3], 1
    %801 = vsyncpa [#allocation6], 1
    %802 = vsyncpa [#allocation4], 1

</llo_original>
